<compile_context>
chip_gen: v6e
topology: v6e:2x2x1
jax: 0.10.0
libtpu: 0.0.40
codegen_flags: <defaults>
</compile_context>

<pallas_src>
import jax
import jax.numpy as jnp
from jax.experimental import pallas as pl
from jax.experimental.pallas import tpu as pltpu


def _pointgencon_kernel(x_ref, rg_ref,
                        w1x_ref, w1r_ref, t1_ref,
                        w2_ref, t2_ref,
                        w3_ref, t3_ref,
                        w4_ref, t4_ref,
                        o_ref):
    """One primitive per grid step.  All params + x are VMEM-resident (constant
    index maps); only rg_ref / o_ref blocks move per step.

    Shapes (channels-first, M = B*N on lanes):
      x_ref : (V, M)            rg_ref : (1, 2, M)
      w1x   : (P, C, V)   w1r : (P, C, 2)   t1 : (P, C, 1)
      w2    : (P, C/2, C)                  t2 : (P, C/2, 1)
      w3    : (P, C/4, C/2)                t3 : (P, C/4, 1)
      w4    : (P, 3, C/4)                  t4 : (P, 3, 1)
      o_ref : (1, 3, M)
    """
    i = pl.program_id(0)

    xT = x_ref[...]            # (V, M)  shared across primitives, loaded once
    rg = rg_ref[0]             # (2, M)  this primitive's random grid

    # conv1 + folded BN1 + ReLU.  x-part on the MXU; rand-grid part (K=2) as
    # two VPU FMAs instead of a tiny matmul.
    w1x = w1x_ref[i]                                           # (C, V)
    w1r = w1r_ref[i]                                           # (C, 2)
    h = jnp.dot(w1x, xT, preferred_element_type=jnp.float32)   # (C, M)
    h = h + w1r[:, 0:1] * rg[0:1, :] + w1r[:, 1:2] * rg[1:2, :] + t1_ref[i]
    h = jnp.maximum(h, 0.0)

    # conv2 + folded BN2 + ReLU
    h = jnp.dot(w2_ref[i], h.astype(w2_ref.dtype),
                preferred_element_type=jnp.float32) + t2_ref[i]
    h = jnp.maximum(h, 0.0)

    # conv3 + folded BN3 + ReLU
    h = jnp.dot(w3_ref[i], h.astype(w3_ref.dtype),
                preferred_element_type=jnp.float32) + t3_ref[i]
    h = jnp.maximum(h, 0.0)

    # conv4 + tanh
    h = jnp.dot(w4_ref[i], h.astype(w4_ref.dtype),
                preferred_element_type=jnp.float32) + t4_ref[i]
    o_ref[0] = jnp.tanh(h)                                     # (3, M) lane-dense


def fold_params(raw, compute_dtype=jnp.float32):
    """Fold conv bias + inference-mode BatchNorm into per-layer (weight, shift)."""
    eps = 1e-5

    def fold(W, b, bn):
        g, be, m, v = bn
        s = g / jnp.sqrt(v + eps)                      # (P, Cout)
        w = (W * s[:, :, None]).astype(compute_dtype)  # scale output channels
        t = (b * s + (be - m * s))[:, :, None].astype(jnp.float32)
        return w, t

    w1, t1 = fold(raw["W1"], raw["b1"], raw["bn1"])
    w2, t2 = fold(raw["W2"], raw["b2"], raw["bn2"])
    w3, t3 = fold(raw["W3"], raw["b3"], raw["bn3"])
    w4 = raw["W4"].astype(compute_dtype)
    t4 = raw["b4"][:, :, None].astype(jnp.float32)
    w1r, w1x = w1[:, :, :2], w1[:, :, 2:]              # split rand-grid / x columns
    return (w1x, w1r, t1, w2, t2, w3, t3, w4, t4)


def caps_decoder_forward(x, rand_grid, raw_params, latent_caps_size, num_points,
                         compute_dtype=jnp.float32):
    """x: (B, latent_caps_size, latent_vec_size); rand_grid: (P, B, 2, N)."""
    B, N, V = x.shape
    assert N == latent_caps_size
    P = num_points // latent_caps_size
    M = B * N

    (w1x, w1r, t1, w2, t2, w3, t3, w4, t4) = fold_params(raw_params, compute_dtype)

    # Channels-first, points-on-lanes layouts (no P-fold duplication of x in HBM).
    xT = jnp.transpose(x, (2, 0, 1)).reshape(V, M).astype(compute_dtype)          # (V, M)
    rgT = jnp.transpose(rand_grid, (0, 2, 1, 3)).reshape(P, 2, M).astype(compute_dtype)

    def resident_spec(a):
        # Full-array block + constant index map -> fetched once, VMEM-resident.
        zeros = (0,) * a.ndim
        return pl.BlockSpec(a.shape, lambda i, _z=zeros: _z)

    params = (w1x, w1r, t1, w2, t2, w3, t3, w4, t4)
    in_arrays = [xT, rgT, *params]
    in_specs = ([resident_spec(xT),
                 pl.BlockSpec((1, 2, M), lambda i: (i, 0, 0))]
                + [resident_spec(a) for a in params])

    out = pl.pallas_call(
        _pointgencon_kernel,
        out_shape=jax.ShapeDtypeStruct((P, 3, M), jnp.float32),
        grid_spec=pltpu.PrefetchScalarGridSpec(
            num_scalar_prefetch=0,
            grid=(P,),
            in_specs=in_specs,
            out_specs=pl.BlockSpec((1, 3, M), lambda i: (i, 0, 0)),
        ),
        compiler_params=pltpu.CompilerParams(
            # disjoint output blocks per primitive -> safe to shard across v7x's 2 TCs
            dimension_semantics=("parallel",)),
    )(*in_arrays)

    # (P, 3, M) -> (P, 3, B, N) -> (B, 3, P, N) -> (B, 3, num_points)
    out = out.reshape(P, 3, B, N)
    out = jnp.transpose(out, (2, 1, 0, 3)).reshape(B, 3, P * N)
    return out


def make_params(key, C, P):
    """Deterministic synthetic raw parameters for P PointGenCon decoders.

    Conv weights are (P, C_out, C_in) (kernel-size-1 Conv1d); BatchNorm is given
    as (gamma, beta, running_mean, running_var) per layer.
    """
    C2, C4 = C // 2, C // 4
    ks = iter(jax.random.split(key, 32))

    def W(cout, cin):
        return (0.1 * jax.random.normal(next(ks), (P, cout, cin))).astype(jnp.float32)

    def vec(c, scale=0.1):
        return (scale * jax.random.normal(next(ks), (P, c))).astype(jnp.float32)

    def bn(c):
        gamma = (1.0 + 0.1 * jax.random.normal(next(ks), (P, c))).astype(jnp.float32)
        beta = (0.1 * jax.random.normal(next(ks), (P, c))).astype(jnp.float32)
        mean = (0.1 * jax.random.normal(next(ks), (P, c))).astype(jnp.float32)
        var = (jnp.abs(jax.random.normal(next(ks), (P, c))) + 0.5).astype(jnp.float32)
        return gamma, beta, mean, var

    return dict(
        W1=W(C, C), b1=vec(C), bn1=bn(C),
        W2=W(C2, C), b2=vec(C2), bn2=bn(C2),
        W3=W(C4, C2), b3=vec(C4), bn3=bn(C4),
        W4=W(3, C4), b4=vec(3),
    )


def reference_forward(x, rand_grid, raw, latent_caps_size, num_points):
    """Pure-JAX reference with PyTorch-style math (conv+bias, then BN, channels-first)."""
    B, N, V = x.shape
    P = num_points // latent_caps_size
    eps = 1e-5
    layers = [(raw["W1"], raw["b1"], raw["bn1"]),
              (raw["W2"], raw["b2"], raw["bn2"]),
              (raw["W3"], raw["b3"], raw["bn3"])]
    outs = []
    for i in range(P):
        h = jnp.concatenate([rand_grid[i], jnp.transpose(x, (0, 2, 1))], axis=1)  # (B, C, N)
        for (W, b, (g, be, m, v)) in layers:
            h = jnp.einsum("dc,bcn->bdn", W[i], h) + b[i][None, :, None]
            h = (g[i][None, :, None] * (h - m[i][None, :, None])
                 / jnp.sqrt(v[i][None, :, None] + eps) + be[i][None, :, None])
            h = jnp.maximum(h, 0.0)
        h = jnp.einsum("dc,bcn->bdn", raw["W4"][i], h) + raw["b4"][i][None, :, None]
        outs.append(jnp.tanh(h))
    return jnp.concatenate(outs, axis=2)


if __name__ == "__main__":
    # Small shapes consistent with the module.
    B = 2
    latent_caps_size = 16      # N
    latent_vec_size = 30       # V  -> bottleneck C = V + 2 = 32
    num_points = 64            # -> nb_primitives P = 4
    P = num_points // latent_caps_size
    C = latent_vec_size + 2

    key = jax.random.PRNGKey(0)
    kx, krg, kp = jax.random.split(key, 3)

    x = jax.random.normal(kx, (B, latent_caps_size, latent_vec_size), dtype=jnp.float32)
    # TODO(synk): PyTorch draws rand_grid via torch .uniform_(0,1) per call; here it is an
    # explicit input (could use pltpu.prng_seed/prng_random_bits in-kernel in production).
    rand_grid = jax.random.uniform(krg, (P, B, 2, latent_caps_size), dtype=jnp.float32)
    raw_params = make_params(kp, C, P)

    out = caps_decoder_forward(x, rand_grid, raw_params, latent_caps_size, num_points)
    out = jax.block_until_ready(out)

    ref = reference_forward(x, rand_grid, raw_params, latent_caps_size, num_points)
    assert out.shape == (B, 3, num_points)
    max_err = float(jnp.max(jnp.abs(out - ref)))
    assert jnp.allclose(out, ref, atol=1e-4, rtol=1e-4), max_err

    # TODO(synk): BatchNorm is implemented in inference mode (running stats folded);
    # PyTorch training-mode batch statistics are not reproduced.
    print("KERNEL_OK")
</pallas_src>

<mosaic_0001>
module attributes {stable_mosaic.version = 11 : i64} {
  func.func @_pointgencon_kernel(%arg0: i32, %arg1: memref<30x32xf32, #tpu.memory_space<vmem>>, %arg2: memref<1x2x32xf32, #tpu.memory_space<vmem>>, %arg3: memref<4x32x30xf32, #tpu.memory_space<vmem>>, %arg4: memref<4x32x2xf32, #tpu.memory_space<vmem>>, %arg5: memref<4x32x1xf32, #tpu.memory_space<vmem>>, %arg6: memref<4x16x32xf32, #tpu.memory_space<vmem>>, %arg7: memref<4x16x1xf32, #tpu.memory_space<vmem>>, %arg8: memref<4x8x16xf32, #tpu.memory_space<vmem>>, %arg9: memref<4x8x1xf32, #tpu.memory_space<vmem>>, %arg10: memref<4x3x8xf32, #tpu.memory_space<vmem>>, %arg11: memref<4x3x1xf32, #tpu.memory_space<vmem>>, %arg12: memref<1x3x32xf32, #tpu.memory_space<vmem>>) attributes {dimension_semantics = [#tpu.dimension_semantics<parallel>], iteration_bounds = array<i64: 4>, scalar_prefetch = 0 : i64, scratch_operands = 0 : i64, tpu.core_type = #tpu.core_type<tc>, window_params = [{pipeline_mode = #tpu.pipeline_mode<synchronous>, transform_indices = @transform_0, window_bounds = array<i64: 30, 32>}, {transform_indices = @transform_1, window_bounds = array<i64: 1, 2, 32>}, {pipeline_mode = #tpu.pipeline_mode<synchronous>, transform_indices = @transform_2, window_bounds = array<i64: 4, 32, 30>}, {pipeline_mode = #tpu.pipeline_mode<synchronous>, transform_indices = @transform_3, window_bounds = array<i64: 4, 32, 2>}, {pipeline_mode = #tpu.pipeline_mode<synchronous>, transform_indices = @transform_4, window_bounds = array<i64: 4, 32, 1>}, {pipeline_mode = #tpu.pipeline_mode<synchronous>, transform_indices = @transform_5, window_bounds = array<i64: 4, 16, 32>}, {pipeline_mode = #tpu.pipeline_mode<synchronous>, transform_indices = @transform_6, window_bounds = array<i64: 4, 16, 1>}, {pipeline_mode = #tpu.pipeline_mode<synchronous>, transform_indices = @transform_7, window_bounds = array<i64: 4, 8, 16>}, {pipeline_mode = #tpu.pipeline_mode<synchronous>, transform_indices = @transform_8, window_bounds = array<i64: 4, 8, 1>}, {pipeline_mode = #tpu.pipeline_mode<synchronous>, transform_indices = @transform_9, window_bounds = array<i64: 4, 3, 8>}, {pipeline_mode = #tpu.pipeline_mode<synchronous>, transform_indices = @transform_10, window_bounds = array<i64: 4, 3, 1>}, {transform_indices = @transform_11, window_bounds = array<i64: 1, 3, 32>}]} {
    %c0 = arith.constant 0 : index
    %c0_0 = arith.constant 0 : index
    %0 = vector.load %arg1[%c0, %c0_0] : memref<30x32xf32, #tpu.memory_space<vmem>>, vector<30x32xf32>
    %c0_1 = arith.constant 0 : index
    %c0_2 = arith.constant 0 : index
    %c0_3 = arith.constant 0 : index
    %1 = vector.load %arg2[%c0_1, %c0_2, %c0_3] : memref<1x2x32xf32, #tpu.memory_space<vmem>>, vector<1x2x32xf32>
    %2 = vector.shape_cast %1 : vector<1x2x32xf32> to vector<2x32xf32>
    %3 = arith.index_cast %arg0 : i32 to index
    %c0_4 = arith.constant 0 : index
    %c0_5 = arith.constant 0 : index
    %4 = vector.load %arg3[%3, %c0_4, %c0_5] : memref<4x32x30xf32, #tpu.memory_space<vmem>>, vector<1x32x30xf32>
    %5 = vector.shape_cast %4 : vector<1x32x30xf32> to vector<32x30xf32>
    %6 = arith.index_cast %arg0 : i32 to index
    %c0_6 = arith.constant 0 : index
    %c0_7 = arith.constant 0 : index
    %7 = vector.load %arg4[%6, %c0_6, %c0_7] : memref<4x32x2xf32, #tpu.memory_space<vmem>>, vector<1x32x2xf32>
    %8 = vector.shape_cast %7 : vector<1x32x2xf32> to vector<32x2xf32>
    %cst = arith.constant dense<0.000000e+00> : vector<32x32xf32>
    %9 = tpu.matmul %5, %0, %cst {dimension_numbers = #tpu.dot_dimension_numbers<[1], [0], [0], [1], [0, 0, 1, 1], [], []>} : vector<32x30xf32>, vector<30x32xf32>, vector<32x32xf32> -> vector<32x32xf32>
    %10 = vector.extract_strided_slice %8 {offsets = [0, 0], sizes = [32, 1], strides = [1, 1]} : vector<32x2xf32> to vector<32x1xf32>
    %11 = vector.extract_strided_slice %2 {offsets = [0, 0], sizes = [1, 32], strides = [1, 1]} : vector<2x32xf32> to vector<1x32xf32>
    %12 = vector.broadcast %10 : vector<32x1xf32> to vector<32x32xf32>
    %13 = vector.broadcast %11 : vector<1x32xf32> to vector<32x32xf32>
    %14 = arith.mulf %12, %13 : vector<32x32xf32>
    %15 = arith.addf %9, %14 : vector<32x32xf32>
    %16 = vector.extract_strided_slice %8 {offsets = [0, 1], sizes = [32, 1], strides = [1, 1]} : vector<32x2xf32> to vector<32x1xf32>
    %17 = vector.extract_strided_slice %2 {offsets = [1, 0], sizes = [1, 32], strides = [1, 1]} : vector<2x32xf32> to vector<1x32xf32>
    %18 = vector.broadcast %16 : vector<32x1xf32> to vector<32x32xf32>
    %19 = vector.broadcast %17 : vector<1x32xf32> to vector<32x32xf32>
    %20 = arith.mulf %18, %19 : vector<32x32xf32>
    %21 = arith.addf %15, %20 : vector<32x32xf32>
    %22 = arith.index_cast %arg0 : i32 to index
    %c0_8 = arith.constant 0 : index
    %c0_9 = arith.constant 0 : index
    %23 = vector.load %arg5[%22, %c0_8, %c0_9] : memref<4x32x1xf32, #tpu.memory_space<vmem>>, vector<1x32x1xf32>
    %24 = vector.shape_cast %23 : vector<1x32x1xf32> to vector<32x1xf32>
    %25 = vector.broadcast %24 : vector<32x1xf32> to vector<32x32xf32>
    %26 = arith.addf %21, %25 : vector<32x32xf32>
    %cst_10 = arith.constant 0.000000e+00 : f32
    %27 = vector.broadcast %cst_10 : f32 to vector<32x32xf32>
    %28 = arith.maximumf %26, %27 : vector<32x32xf32>
    %29 = arith.index_cast %arg0 : i32 to index
    %c0_11 = arith.constant 0 : index
    %c0_12 = arith.constant 0 : index
    %30 = vector.load %arg6[%29, %c0_11, %c0_12] : memref<4x16x32xf32, #tpu.memory_space<vmem>>, vector<1x16x32xf32>
    %31 = vector.shape_cast %30 : vector<1x16x32xf32> to vector<16x32xf32>
    %cst_13 = arith.constant dense<0.000000e+00> : vector<16x32xf32>
    %32 = tpu.matmul %31, %28, %cst_13 {dimension_numbers = #tpu.dot_dimension_numbers<[1], [0], [0], [1], [0, 0, 1, 1], [], []>} : vector<16x32xf32>, vector<32x32xf32>, vector<16x32xf32> -> vector<16x32xf32>
    %33 = arith.index_cast %arg0 : i32 to index
    %c0_14 = arith.constant 0 : index
    %c0_15 = arith.constant 0 : index
    %34 = vector.load %arg7[%33, %c0_14, %c0_15] : memref<4x16x1xf32, #tpu.memory_space<vmem>>, vector<1x16x1xf32>
    %35 = vector.shape_cast %34 : vector<1x16x1xf32> to vector<16x1xf32>
    %36 = vector.broadcast %35 : vector<16x1xf32> to vector<16x32xf32>
    %37 = arith.addf %32, %36 : vector<16x32xf32>
    %cst_16 = arith.constant 0.000000e+00 : f32
    %38 = vector.broadcast %cst_16 : f32 to vector<16x32xf32>
    %39 = arith.maximumf %37, %38 : vector<16x32xf32>
    %40 = arith.index_cast %arg0 : i32 to index
    %c0_17 = arith.constant 0 : index
    %c0_18 = arith.constant 0 : index
    %41 = vector.load %arg8[%40, %c0_17, %c0_18] : memref<4x8x16xf32, #tpu.memory_space<vmem>>, vector<1x8x16xf32>
    %42 = vector.shape_cast %41 : vector<1x8x16xf32> to vector<8x16xf32>
    %cst_19 = arith.constant dense<0.000000e+00> : vector<8x32xf32>
    %43 = tpu.matmul %42, %39, %cst_19 {dimension_numbers = #tpu.dot_dimension_numbers<[1], [0], [0], [1], [0, 0, 1, 1], [], []>} : vector<8x16xf32>, vector<16x32xf32>, vector<8x32xf32> -> vector<8x32xf32>
    %44 = arith.index_cast %arg0 : i32 to index
    %c0_20 = arith.constant 0 : index
    %c0_21 = arith.constant 0 : index
    %45 = vector.load %arg9[%44, %c0_20, %c0_21] : memref<4x8x1xf32, #tpu.memory_space<vmem>>, vector<1x8x1xf32>
    %46 = vector.shape_cast %45 : vector<1x8x1xf32> to vector<8x1xf32>
    %47 = vector.broadcast %46 : vector<8x1xf32> to vector<8x32xf32>
    %48 = arith.addf %43, %47 : vector<8x32xf32>
    %cst_22 = arith.constant 0.000000e+00 : f32
    %49 = vector.broadcast %cst_22 : f32 to vector<8x32xf32>
    %50 = arith.maximumf %48, %49 : vector<8x32xf32>
    %51 = arith.index_cast %arg0 : i32 to index
    %c0_23 = arith.constant 0 : index
    %c0_24 = arith.constant 0 : index
    %52 = vector.load %arg10[%51, %c0_23, %c0_24] : memref<4x3x8xf32, #tpu.memory_space<vmem>>, vector<1x3x8xf32>
    %53 = vector.shape_cast %52 : vector<1x3x8xf32> to vector<3x8xf32>
    %cst_25 = arith.constant dense<0.000000e+00> : vector<3x32xf32>
    %54 = tpu.matmul %53, %50, %cst_25 {dimension_numbers = #tpu.dot_dimension_numbers<[1], [0], [0], [1], [0, 0, 1, 1], [], []>} : vector<3x8xf32>, vector<8x32xf32>, vector<3x32xf32> -> vector<3x32xf32>
    %55 = arith.index_cast %arg0 : i32 to index
    %c0_26 = arith.constant 0 : index
    %c0_27 = arith.constant 0 : index
    %56 = vector.load %arg11[%55, %c0_26, %c0_27] : memref<4x3x1xf32, #tpu.memory_space<vmem>>, vector<1x3x1xf32>
    %57 = vector.shape_cast %56 : vector<1x3x1xf32> to vector<3x1xf32>
    %58 = vector.broadcast %57 : vector<3x1xf32> to vector<3x32xf32>
    %59 = arith.addf %54, %58 : vector<3x32xf32>
    %60 = math.tanh %59 : vector<3x32xf32>
    %c0_28 = arith.constant 0 : index
    %c0_29 = arith.constant 0 : index
    %c0_30 = arith.constant 0 : index
    %61 = vector.load %arg12[%c0_28, %c0_29, %c0_30] : memref<1x3x32xf32, #tpu.memory_space<vmem>>, vector<1x3x32xf32>
    %62 = vector.shape_cast %61 : vector<1x3x32xf32> to vector<3x32xf32>
    %63 = vector.shape_cast %60 : vector<3x32xf32> to vector<1x3x32xf32>
    tpu.vector_store %arg12[%c0_28, %c0_29, %c0_30], %63 {strides = array<i32>} : memref<1x3x32xf32, #tpu.memory_space<vmem>>, vector<1x3x32xf32>,
    return
  }
  func.func @transform_0(%arg0: i32) -> (i32, i32) {
    %c0_i32 = arith.constant 0 : i32
    %c0_i32_0 = arith.constant 0 : i32
    %c0_i32_1 = arith.constant 0 : i32
    return %c0_i32, %c0_i32_0 : i32, i32
  }
  func.func @transform_1(%arg0: i32) -> (i32, i32, i32) {
    %c0_i32 = arith.constant 0 : i32
    %c0_i32_0 = arith.constant 0 : i32
    %c0_i32_1 = arith.constant 0 : i32
    return %arg0, %c0_i32, %c0_i32_0 : i32, i32, i32
  }
  func.func @transform_2(%arg0: i32) -> (i32, i32, i32) {
    %c0_i32 = arith.constant 0 : i32
    %c0_i32_0 = arith.constant 0 : i32
    %c0_i32_1 = arith.constant 0 : i32
    %c0_i32_2 = arith.constant 0 : i32
    return %c0_i32, %c0_i32_0, %c0_i32_1 : i32, i32, i32
  }
  func.func @transform_3(%arg0: i32) -> (i32, i32, i32) {
    %c0_i32 = arith.constant 0 : i32
    %c0_i32_0 = arith.constant 0 : i32
    %c0_i32_1 = arith.constant 0 : i32
    %c0_i32_2 = arith.constant 0 : i32
    return %c0_i32, %c0_i32_0, %c0_i32_1 : i32, i32, i32
  }
  func.func @transform_4(%arg0: i32) -> (i32, i32, i32) {
    %c0_i32 = arith.constant 0 : i32
    %c0_i32_0 = arith.constant 0 : i32
    %c0_i32_1 = arith.constant 0 : i32
    %c0_i32_2 = arith.constant 0 : i32
    return %c0_i32, %c0_i32_0, %c0_i32_1 : i32, i32, i32
  }
  func.func @transform_5(%arg0: i32) -> (i32, i32, i32) {
    %c0_i32 = arith.constant 0 : i32
    %c0_i32_0 = arith.constant 0 : i32
    %c0_i32_1 = arith.constant 0 : i32
    %c0_i32_2 = arith.constant 0 : i32
    return %c0_i32, %c0_i32_0, %c0_i32_1 : i32, i32, i32
  }
  func.func @transform_6(%arg0: i32) -> (i32, i32, i32) {
    %c0_i32 = arith.constant 0 : i32
    %c0_i32_0 = arith.constant 0 : i32
    %c0_i32_1 = arith.constant 0 : i32
    %c0_i32_2 = arith.constant 0 : i32
    return %c0_i32, %c0_i32_0, %c0_i32_1 : i32, i32, i32
  }
  func.func @transform_7(%arg0: i32) -> (i32, i32, i32) {
    %c0_i32 = arith.constant 0 : i32
    %c0_i32_0 = arith.constant 0 : i32
    %c0_i32_1 = arith.constant 0 : i32
    %c0_i32_2 = arith.constant 0 : i32
    return %c0_i32, %c0_i32_0, %c0_i32_1 : i32, i32, i32
  }
  func.func @transform_8(%arg0: i32) -> (i32, i32, i32) {
    %c0_i32 = arith.constant 0 : i32
    %c0_i32_0 = arith.constant 0 : i32
    %c0_i32_1 = arith.constant 0 : i32
    %c0_i32_2 = arith.constant 0 : i32
    return %c0_i32, %c0_i32_0, %c0_i32_1 : i32, i32, i32
  }
  func.func @transform_9(%arg0: i32) -> (i32, i32, i32) {
    %c0_i32 = arith.constant 0 : i32
    %c0_i32_0 = arith.constant 0 : i32
    %c0_i32_1 = arith.constant 0 : i32
    %c0_i32_2 = arith.constant 0 : i32
    return %c0_i32, %c0_i32_0, %c0_i32_1 : i32, i32, i32
  }
  func.func @transform_10(%arg0: i32) -> (i32, i32, i32) {
    %c0_i32 = arith.constant 0 : i32
    %c0_i32_0 = arith.constant 0 : i32
    %c0_i32_1 = arith.constant 0 : i32
    %c0_i32_2 = arith.constant 0 : i32
    return %c0_i32, %c0_i32_0, %c0_i32_1 : i32, i32, i32
  }
  func.func @transform_11(%arg0: i32) -> (i32, i32, i32) {
    %c0_i32 = arith.constant 0 : i32
    %c0_i32_0 = arith.constant 0 : i32
    %c0_i32_1 = arith.constant 0 : i32
    return %arg0, %c0_i32, %c0_i32_0 : i32, i32, i32
  }
}

</mosaic_0001>

<llo_original>
// kernel: tpu_custom_call.1
$region0: #{tpu_custom_call.1}
  #allocation0 [shape = 'u32[]', space=smem, size = 0x4, offset = 0x4, fixed_abs, tag = 'smem constant byte address 0x4 - core index']
  #allocation1 [shape = 'u32[144,128]{1,0:T(1,128)}', space=vmem, size = 0x12000, scoped, tag = 'internal scratch']
  %s0 = inlined_call_operand.vmem [shape: f32[30,32], index: 0, kind: input, shape index: {}]
  %s1 = inlined_call_operand.vmem [shape: f32[4,2,32], index: 1, kind: input, shape index: {}]
  %s2 = inlined_call_operand.vmem [shape: f32[4,32,30], index: 2, kind: input, shape index: {}]
  %s3 = inlined_call_operand.vmem [shape: f32[4,32,2], index: 3, kind: input, shape index: {}]
  %s4 = inlined_call_operand.vmem [shape: f32[4,32,1], index: 4, kind: input, shape index: {}]
  %s5 = inlined_call_operand.vmem [shape: f32[4,16,32], index: 5, kind: input, shape index: {}]
  %s6 = inlined_call_operand.vmem [shape: f32[4,16,1], index: 6, kind: input, shape index: {}]
  %s7 = inlined_call_operand.vmem [shape: f32[4,8,16], index: 7, kind: input, shape index: {}]
  %s8 = inlined_call_operand.vmem [shape: f32[4,8,1], index: 8, kind: input, shape index: {}]
  %s9 = inlined_call_operand.vmem [shape: f32[4,3,8], index: 9, kind: input, shape index: {}]
  %s10 = inlined_call_operand.vmem [shape: f32[4,3,1], index: 10, kind: input, shape index: {}]
  %s11 = inlined_call_operand.vmem [shape: f32[4,3,32], index: 11, kind: output, shape index: {}]
  %s12 = sld [smem:[#allocation0]]
  $region77: #{tpu_custom_call.1} parent=0
    _
  %s14 = ssub.s32 1, %s12
  %s15 = scalar_select 0, %s14, %s12
  loop: start=0, step=1, limit=6
  $region2: #{tpu_custom_call.1} parent=0 // loop_pre_header
    _
  $region3: #{tpu_custom_call.1} parent=0 // loop_header
    %s17 = sphi 0, %s21
    %p18 = scmp.ge.s32.totalorder %s17, 6
    %s25 = sphi 0, %s25
    %s27 = sphi 0, %s25
    %s28 = sphi 0, %s27
    %s42 = sphi 0, %s28
    %s48 = sphi 0, %s50
    %s51 = sphi 0, %s48
    %s52 = sphi 0, %s51
    %s68 = sphi 0, %s52
    %s72 = sphi 0, %s72
    %s74 = sphi 0, %s72
    %s75 = sphi 0, %s74
    %s89 = sphi 0, %s75
    %s93 = sphi 0, %s93
    %s95 = sphi 0, %s93
    %s96 = sphi 0, %s95
    %s110 = sphi 0, %s96
    %s114 = sphi 0, %s114
    %s116 = sphi 0, %s114
    %s117 = sphi 0, %s116
    %s131 = sphi 0, %s117
    %s135 = sphi 0, %s135
    %s137 = sphi 0, %s135
    %s138 = sphi 0, %s137
    %s152 = sphi 0, %s138
    %s156 = sphi 0, %s156
    %s158 = sphi 0, %s156
    %s159 = sphi 0, %s158
    %s173 = sphi 0, %s159
    %s177 = sphi 0, %s177
    %s179 = sphi 0, %s177
    %s180 = sphi 0, %s179
    %s194 = sphi 0, %s180
    %s198 = sphi 0, %s198
    %s200 = sphi 0, %s198
    %s201 = sphi 0, %s200
    %s215 = sphi 0, %s201
    %s219 = sphi 0, %s219
    %s221 = sphi 0, %s219
    %s222 = sphi 0, %s221
    %s236 = sphi 0, %s222
    %s240 = sphi 0, %s240
    %s242 = sphi 0, %s240
    %s243 = sphi 0, %s242
    %s257 = sphi 0, %s243
    %s263 = sphi 0, %s265
    %s266 = sphi 0, %s263
    %s267 = sphi 0, %s266
    %s283 = sphi 0, %s267
  $region4: #{tpu_custom_call.1} parent=0 // loop_header_branch
    %20 = sbr.rel (%p18) target = $region8
  $region5: #{tpu_custom_call.1} parent=0 // loop_body
    %s22 = ssub.s32 %s17, 1
    %s23 = ssub.s32 %s17, 2
    %s24 = sadd.s32 %s17, 1
    %s26 = sadd.s32 %s25, 1
    %p29 = scmp.eq.s32.totalorder %s17, 3
    %p30 = scmp.ne.s32.totalorder %s25, %s27
    %p31 = scmp.eq.s32.totalorder %s17, 0
    %p32 = por %p30, %p31
    %p33 = scmp.ne.s32.totalorder %s25, %s27
    %p34 = scmp.eq.s32.totalorder %s22, 3
    %p35 = por %p33, %p34
    %p36 = scmp.ne.s32.totalorder %s27, %s28
    %p37 = scmp.eq.s32.totalorder %s22, 0
    %p38 = por %p36, %p37
    %p39 = scmp.ne.s32.totalorder %s27, %s28
    %p40 = scmp.eq.s32.totalorder %s23, 3
    %p41 = por %p39, %p40
    %p43 = scmp.ne.s32.totalorder %s28, %s42
    %p44 = scmp.eq.s32.totalorder %s23, 0
    %p45 = por %p43, %p44
    %s46 = ssub.s32 %s17, %s24
    %p47 = scmp.eq.s32.totalorder %s46, 0
    %s49 = sadd.s32 %s48, 1
    %s50 = scalar_select %p47, %s48, %s49
    %p53 = pneg %p47
    %p54 = scmp.eq.s32.totalorder %s17, 3
    %p55 = por %p53, %p54
    %p56 = scmp.ne.s32.totalorder %s48, %s51
    %p57 = scmp.eq.s32.totalorder %s17, 0
    %p58 = por %p56, %p57
    %p59 = scmp.ne.s32.totalorder %s48, %s51
    %p60 = scmp.eq.s32.totalorder %s22, 3
    %p61 = por %p59, %p60
    %p62 = scmp.ne.s32.totalorder %s51, %s52
    %p63 = scmp.eq.s32.totalorder %s22, 0
    %p64 = por %p62, %p63
    %p65 = scmp.ne.s32.totalorder %s51, %s52
    %p66 = scmp.eq.s32.totalorder %s23, 3
    %p67 = por %p65, %p66
    %p69 = scmp.ne.s32.totalorder %s52, %s68
    %p70 = scmp.eq.s32.totalorder %s23, 0
    %p71 = por %p69, %p70
    %s73 = sadd.s32 %s72, 1
    %p76 = scmp.eq.s32.totalorder %s17, 3
    %p77 = scmp.ne.s32.totalorder %s72, %s74
    %p78 = scmp.eq.s32.totalorder %s17, 0
    %p79 = por %p77, %p78
    %p80 = scmp.ne.s32.totalorder %s72, %s74
    %p81 = scmp.eq.s32.totalorder %s22, 3
    %p82 = por %p80, %p81
    %p83 = scmp.ne.s32.totalorder %s74, %s75
    %p84 = scmp.eq.s32.totalorder %s22, 0
    %p85 = por %p83, %p84
    %p86 = scmp.ne.s32.totalorder %s74, %s75
    %p87 = scmp.eq.s32.totalorder %s23, 3
    %p88 = por %p86, %p87
    %p90 = scmp.ne.s32.totalorder %s75, %s89
    %p91 = scmp.eq.s32.totalorder %s23, 0
    %p92 = por %p90, %p91
    %s94 = sadd.s32 %s93, 1
    %p97 = scmp.eq.s32.totalorder %s17, 3
    %p98 = scmp.ne.s32.totalorder %s93, %s95
    %p99 = scmp.eq.s32.totalorder %s17, 0
    %p100 = por %p98, %p99
    %p101 = scmp.ne.s32.totalorder %s93, %s95
    %p102 = scmp.eq.s32.totalorder %s22, 3
    %p103 = por %p101, %p102
    %p104 = scmp.ne.s32.totalorder %s95, %s96
    %p105 = scmp.eq.s32.totalorder %s22, 0
    %p106 = por %p104, %p105
    %p107 = scmp.ne.s32.totalorder %s95, %s96
    %p108 = scmp.eq.s32.totalorder %s23, 3
    %p109 = por %p107, %p108
    %p111 = scmp.ne.s32.totalorder %s96, %s110
    %p112 = scmp.eq.s32.totalorder %s23, 0
    %p113 = por %p111, %p112
    %s115 = sadd.s32 %s114, 1
    %p118 = scmp.eq.s32.totalorder %s17, 3
    %p119 = scmp.ne.s32.totalorder %s114, %s116
    %p120 = scmp.eq.s32.totalorder %s17, 0
    %p121 = por %p119, %p120
    %p122 = scmp.ne.s32.totalorder %s114, %s116
    %p123 = scmp.eq.s32.totalorder %s22, 3
    %p124 = por %p122, %p123
    %p125 = scmp.ne.s32.totalorder %s116, %s117
    %p126 = scmp.eq.s32.totalorder %s22, 0
    %p127 = por %p125, %p126
    %p128 = scmp.ne.s32.totalorder %s116, %s117
    %p129 = scmp.eq.s32.totalorder %s23, 3
    %p130 = por %p128, %p129
    %p132 = scmp.ne.s32.totalorder %s117, %s131
    %p133 = scmp.eq.s32.totalorder %s23, 0
    %p134 = por %p132, %p133
    %s136 = sadd.s32 %s135, 1
    %p139 = scmp.eq.s32.totalorder %s17, 3
    %p140 = scmp.ne.s32.totalorder %s135, %s137
    %p141 = scmp.eq.s32.totalorder %s17, 0
    %p142 = por %p140, %p141
    %p143 = scmp.ne.s32.totalorder %s135, %s137
    %p144 = scmp.eq.s32.totalorder %s22, 3
    %p145 = por %p143, %p144
    %p146 = scmp.ne.s32.totalorder %s137, %s138
    %p147 = scmp.eq.s32.totalorder %s22, 0
    %p148 = por %p146, %p147
    %p149 = scmp.ne.s32.totalorder %s137, %s138
    %p150 = scmp.eq.s32.totalorder %s23, 3
    %p151 = por %p149, %p150
    %p153 = scmp.ne.s32.totalorder %s138, %s152
    %p154 = scmp.eq.s32.totalorder %s23, 0
    %p155 = por %p153, %p154
    %s157 = sadd.s32 %s156, 1
    %p160 = scmp.eq.s32.totalorder %s17, 3
    %p161 = scmp.ne.s32.totalorder %s156, %s158
    %p162 = scmp.eq.s32.totalorder %s17, 0
    %p163 = por %p161, %p162
    %p164 = scmp.ne.s32.totalorder %s156, %s158
    %p165 = scmp.eq.s32.totalorder %s22, 3
    %p166 = por %p164, %p165
    %p167 = scmp.ne.s32.totalorder %s158, %s159
    %p168 = scmp.eq.s32.totalorder %s22, 0
    %p169 = por %p167, %p168
    %p170 = scmp.ne.s32.totalorder %s158, %s159
    %p171 = scmp.eq.s32.totalorder %s23, 3
    %p172 = por %p170, %p171
    %p174 = scmp.ne.s32.totalorder %s159, %s173
    %p175 = scmp.eq.s32.totalorder %s23, 0
    %p176 = por %p174, %p175
    %s178 = sadd.s32 %s177, 1
    %p181 = scmp.eq.s32.totalorder %s17, 3
    %p182 = scmp.ne.s32.totalorder %s177, %s179
    %p183 = scmp.eq.s32.totalorder %s17, 0
    %p184 = por %p182, %p183
    %p185 = scmp.ne.s32.totalorder %s177, %s179
    %p186 = scmp.eq.s32.totalorder %s22, 3
    %p187 = por %p185, %p186
    %p188 = scmp.ne.s32.totalorder %s179, %s180
    %p189 = scmp.eq.s32.totalorder %s22, 0
    %p190 = por %p188, %p189
    %p191 = scmp.ne.s32.totalorder %s179, %s180
    %p192 = scmp.eq.s32.totalorder %s23, 3
    %p193 = por %p191, %p192
    %p195 = scmp.ne.s32.totalorder %s180, %s194
    %p196 = scmp.eq.s32.totalorder %s23, 0
    %p197 = por %p195, %p196
    %s199 = sadd.s32 %s198, 1
    %p202 = scmp.eq.s32.totalorder %s17, 3
    %p203 = scmp.ne.s32.totalorder %s198, %s200
    %p204 = scmp.eq.s32.totalorder %s17, 0
    %p205 = por %p203, %p204
    %p206 = scmp.ne.s32.totalorder %s198, %s200
    %p207 = scmp.eq.s32.totalorder %s22, 3
    %p208 = por %p206, %p207
    %p209 = scmp.ne.s32.totalorder %s200, %s201
    %p210 = scmp.eq.s32.totalorder %s22, 0
    %p211 = por %p209, %p210
    %p212 = scmp.ne.s32.totalorder %s200, %s201
    %p213 = scmp.eq.s32.totalorder %s23, 3
    %p214 = por %p212, %p213
    %p216 = scmp.ne.s32.totalorder %s201, %s215
    %p217 = scmp.eq.s32.totalorder %s23, 0
    %p218 = por %p216, %p217
    %s220 = sadd.s32 %s219, 1
    %p223 = scmp.eq.s32.totalorder %s17, 3
    %p224 = scmp.ne.s32.totalorder %s219, %s221
    %p225 = scmp.eq.s32.totalorder %s17, 0
    %p226 = por %p224, %p225
    %p227 = scmp.ne.s32.totalorder %s219, %s221
    %p228 = scmp.eq.s32.totalorder %s22, 3
    %p229 = por %p227, %p228
    %p230 = scmp.ne.s32.totalorder %s221, %s222
    %p231 = scmp.eq.s32.totalorder %s22, 0
    %p232 = por %p230, %p231
    %p233 = scmp.ne.s32.totalorder %s221, %s222
    %p234 = scmp.eq.s32.totalorder %s23, 3
    %p235 = por %p233, %p234
    %p237 = scmp.ne.s32.totalorder %s222, %s236
    %p238 = scmp.eq.s32.totalorder %s23, 0
    %p239 = por %p237, %p238
    %s241 = sadd.s32 %s240, 1
    %p244 = scmp.eq.s32.totalorder %s17, 3
    %p245 = scmp.ne.s32.totalorder %s240, %s242
    %p246 = scmp.eq.s32.totalorder %s17, 0
    %p247 = por %p245, %p246
    %p248 = scmp.ne.s32.totalorder %s240, %s242
    %p249 = scmp.eq.s32.totalorder %s22, 3
    %p250 = por %p248, %p249
    %p251 = scmp.ne.s32.totalorder %s242, %s243
    %p252 = scmp.eq.s32.totalorder %s22, 0
    %p253 = por %p251, %p252
    %p254 = scmp.ne.s32.totalorder %s242, %s243
    %p255 = scmp.eq.s32.totalorder %s23, 3
    %p256 = por %p254, %p255
    %p258 = scmp.ne.s32.totalorder %s243, %s257
    %p259 = scmp.eq.s32.totalorder %s23, 0
    %p260 = por %p258, %p259
    %s261 = ssub.s32 %s17, %s24
    %p262 = scmp.eq.s32.totalorder %s261, 0
    %s264 = sadd.s32 %s263, 1
    %s265 = scalar_select %p262, %s263, %s264
    %p268 = pneg %p262
    %p269 = scmp.eq.s32.totalorder %s17, 3
    %p270 = por %p268, %p269
    %p271 = scmp.ne.s32.totalorder %s263, %s266
    %p272 = scmp.eq.s32.totalorder %s17, 0
    %p273 = por %p271, %p272
    %p274 = scmp.ne.s32.totalorder %s263, %s266
    %p275 = scmp.eq.s32.totalorder %s22, 3
    %p276 = por %p274, %p275
    %p277 = scmp.ne.s32.totalorder %s266, %s267
    %p278 = scmp.eq.s32.totalorder %s22, 0
    %p279 = por %p277, %p278
    %p280 = scmp.ne.s32.totalorder %s266, %s267
    %p281 = scmp.eq.s32.totalorder %s23, 3
    %p282 = por %p280, %p281
    %p284 = scmp.ne.s32.totalorder %s267, %s283
    %p285 = scmp.eq.s32.totalorder %s23, 0
    %p286 = por %p284, %p285
    %p287 = scmp.le.s32.totalorder 1, %s17
    %p288 = scmp.lt.s32.totalorder %s17, 5
    %p289 = pnand %p287, %p288
    %p290 = pneg %p289
    // Predicated region
    $region9: #{tpu_custom_call.1} parent=5 // pred_check
      _
    $region10: #{tpu_custom_call.1} parent=5 // pred_check_branch
      %292 = sbr.rel (%p289) target = $region12
    $region11: #{tpu_custom_call.1} parent=5 // pred_region
      %s293 = ssub.s32 %s17, 1
      // Predicated region
      $region13: #{tpu_custom_call.1} parent=11 // pred_check
        %p294 = pneg %p38
      $region14: #{tpu_custom_call.1} parent=11 // pred_check_branch
        %296 = sbr.rel (%p294) target = $region16
      $region15: #{tpu_custom_call.1} parent=11 // pred_region
        _
      $region16: #{tpu_custom_call.1} parent=11 // pred_fallthru
        _
      // Predicated region
      $region17: #{tpu_custom_call.1} parent=11 // pred_check
        %p297 = pneg %p85
      $region18: #{tpu_custom_call.1} parent=11 // pred_check_branch
        %299 = sbr.rel (%p297) target = $region20
      $region19: #{tpu_custom_call.1} parent=11 // pred_region
        _
      $region20: #{tpu_custom_call.1} parent=11 // pred_fallthru
        _
      // Predicated region
      $region21: #{tpu_custom_call.1} parent=11 // pred_check
        %p300 = pneg %p106
      $region22: #{tpu_custom_call.1} parent=11 // pred_check_branch
        %302 = sbr.rel (%p300) target = $region24
      $region23: #{tpu_custom_call.1} parent=11 // pred_region
        _
      $region24: #{tpu_custom_call.1} parent=11 // pred_fallthru
        _
      // Predicated region
      $region25: #{tpu_custom_call.1} parent=11 // pred_check
        %p303 = pneg %p127
      $region26: #{tpu_custom_call.1} parent=11 // pred_check_branch
        %305 = sbr.rel (%p303) target = $region28
      $region27: #{tpu_custom_call.1} parent=11 // pred_region
        _
      $region28: #{tpu_custom_call.1} parent=11 // pred_fallthru
        _
      // Predicated region
      $region29: #{tpu_custom_call.1} parent=11 // pred_check
        %p306 = pneg %p148
      $region30: #{tpu_custom_call.1} parent=11 // pred_check_branch
        %308 = sbr.rel (%p306) target = $region32
      $region31: #{tpu_custom_call.1} parent=11 // pred_region
        _
      $region32: #{tpu_custom_call.1} parent=11 // pred_fallthru
        _
      // Predicated region
      $region33: #{tpu_custom_call.1} parent=11 // pred_check
        %p309 = pneg %p169
      $region34: #{tpu_custom_call.1} parent=11 // pred_check_branch
        %311 = sbr.rel (%p309) target = $region36
      $region35: #{tpu_custom_call.1} parent=11 // pred_region
        _
      $region36: #{tpu_custom_call.1} parent=11 // pred_fallthru
        _
      // Predicated region
      $region37: #{tpu_custom_call.1} parent=11 // pred_check
        %p312 = pneg %p190
      $region38: #{tpu_custom_call.1} parent=11 // pred_check_branch
        %314 = sbr.rel (%p312) target = $region40
      $region39: #{tpu_custom_call.1} parent=11 // pred_region
        _
      $region40: #{tpu_custom_call.1} parent=11 // pred_fallthru
        _
      // Predicated region
      $region41: #{tpu_custom_call.1} parent=11 // pred_check
        %p315 = pneg %p211
      $region42: #{tpu_custom_call.1} parent=11 // pred_check_branch
        %317 = sbr.rel (%p315) target = $region44
      $region43: #{tpu_custom_call.1} parent=11 // pred_region
        _
      $region44: #{tpu_custom_call.1} parent=11 // pred_fallthru
        _
      // Predicated region
      $region45: #{tpu_custom_call.1} parent=11 // pred_check
        %p318 = pneg %p232
      $region46: #{tpu_custom_call.1} parent=11 // pred_check_branch
        %320 = sbr.rel (%p318) target = $region48
      $region47: #{tpu_custom_call.1} parent=11 // pred_region
        _
      $region48: #{tpu_custom_call.1} parent=11 // pred_fallthru
        _
      // Predicated region
      $region49: #{tpu_custom_call.1} parent=11 // pred_check
        %p321 = pneg %p253
      $region50: #{tpu_custom_call.1} parent=11 // pred_check_branch
        %323 = sbr.rel (%p321) target = $region52
      $region51: #{tpu_custom_call.1} parent=11 // pred_region
        _
      $region52: #{tpu_custom_call.1} parent=11 // pred_fallthru
        _
    $region12: #{tpu_custom_call.1} parent=5 // pred_fallthru
      _
    %p324 = scmp.lt.s32.totalorder %s17, 4
    // Predicated region
    $region53: #{tpu_custom_call.1} parent=5 // pred_check
      %p325 = pneg %p324
    $region54: #{tpu_custom_call.1} parent=5 // pred_check_branch
      %327 = sbr.rel (%p325) target = $region56
    $region55: #{tpu_custom_call.1} parent=5 // pred_region
      // Predicated region
      $region57: #{tpu_custom_call.1} parent=55 // pred_check
        %p328 = pneg %p58
      $region58: #{tpu_custom_call.1} parent=55 // pred_check_branch
        %330 = sbr.rel (%p328) target = $region60
      $region59: #{tpu_custom_call.1} parent=55 // pred_region
        %p331 = scmp.lt.s32.totalorder %s17, 3
        %s332 = scalar_select %p331, %s17, 3
        %s333 = smul.addr %s332, 2
        %s334 = scalar_lea.vmem %s1, %s333
      $region60: #{tpu_custom_call.1} parent=55 // pred_fallthru
        _
    $region56: #{tpu_custom_call.1} parent=5 // pred_fallthru
      _
    %p335 = scmp.le.s32.totalorder 1, %s17
    %p336 = scmp.lt.s32.totalorder %s17, 5
    %p337 = pnand %p335, %p336
    %p338 = pneg %p337
    // Predicated region
    $region61: #{tpu_custom_call.1} parent=5 // pred_check
      _
    $region62: #{tpu_custom_call.1} parent=5 // pred_check_branch
      %340 = sbr.rel (%p337) target = $region64
    $region63: #{tpu_custom_call.1} parent=5 // pred_region
      %s341 = ssub.s32 %s17, 1
      %p342 = pneg %p38
      %p343 = pneg %p35
      %p344 = scmp.lt.s32.totalorder %s22, 3
      %s345 = scalar_select %p344, %s22, 3
      %s346 = smul.addr %s345, 2
      %s347 = scalar_lea.vmem %s1, %s346
      %p348 = pneg %p64
      %p349 = pneg %p61
      %p350 = pneg %p85
      %p351 = pneg %p82
      %p352 = pneg %p106
      %p353 = pneg %p103
      %p354 = pneg %p127
      %p355 = pneg %p124
      %p356 = pneg %p148
      %p357 = pneg %p145
      %p358 = pneg %p169
      %p359 = pneg %p166
      %p360 = pneg %p190
      %p361 = pneg %p187
      %p362 = pneg %p211
      %p363 = pneg %p208
      %p364 = pneg %p232
      %p365 = pneg %p229
      %p366 = pneg %p253
      %p367 = pneg %p250
      %p368 = pneg %p279
      %p369 = pneg %p276
      %p370 = scmp.lt.s32.totalorder %s22, 3
      %s371 = scalar_select %p370, %s22, 3
      %s372 = smul.addr %s371, 4
      %s373 = scalar_lea.vmem %s11, %s372
      %p374 = scmp.lt.s32.totalorder %s22, 3
      %s375 = scalar_select %p374, %s22, 3
      %s376 = smul.addr %s375, 2
      %s377 = scalar_lea.vmem %s1, %s376
      %p378 = scmp.lt.s32.totalorder %s22, 3
      %s379 = scalar_select %p378, %s22, 3
      %s380 = smul.addr %s379, 4
      %s381 = scalar_lea.vmem %s11, %s380
      %v382 = vld [vmem:[%s0] sm:$0xff]
      %v383 = vld [vmem:[%s0 + $0x8] sm:$0xff]
      %v384 = vld [vmem:[%s0 + $0x10] sm:$0xff]
      %v385 = vld [vmem:[%s0 + $0x18] sm:$0x3f]
      %v386 = vld [vmem:[%s377] sm:$0x3]
      %s387 = smul.u32 %s22, 32
      %s388 = scalar_lea.vmem %s2, %s387
      %v389 = vld [vmem:[%s388] sm:$0xff]
      %v390 = vld [vmem:[%s388 + $0x8] sm:$0xff]
      %v391 = vld [vmem:[%s388 + $0x10] sm:$0xff]
      %v392 = vld [vmem:[%s388 + $0x18] sm:$0xff]
      %s393 = scalar_lea.vmem %s3, %s387
      %v394 = vld [vmem:[%s393] sm:$0xff]
      %v395 = vld [vmem:[%s393 + $0x8] sm:$0xff]
      %v396 = vld [vmem:[%s393 + $0x10] sm:$0xff]
      %v397 = vld [vmem:[%s393 + $0x18] sm:$0xff]
      %399 = vset.pattern.permute.xlu0 0
      %400 = vperm.xlu0 %399, %v394
      %v401 = vpop.permute.xlu0 %400
      %404 = vset.pattern.permute.xlu0 0
      %405 = vperm.xlu0 %404, %v395
      %v406 = vpop.permute.xlu0 %405
      %409 = vset.pattern.permute.xlu0 0
      %410 = vperm.xlu0 %409, %v396
      %v411 = vpop.permute.xlu0 %410
      %414 = vset.pattern.permute.xlu0 0
      %415 = vperm.xlu0 %414, %v397
      %v416 = vpop.permute.xlu0 %415
      %v418 = vlaneseq
      %v419 = vshrl.u32 %v418, 7
      %v420 = vsub.s32 0, %v419
      %v421 = vrot.slane %v386, %v420
      %v422 = vmul.f32 %v401, %v421
      %v423 = vmul.f32 %v406, %v421
      %v424 = vmul.f32 %v411, %v421
      %v425 = vmul.f32 %v416, %v421
      %vm426 = vcmask 244736
      %v428 = vsel %vm426, %v389, 0
      %v431 = vsel %vm426, %v390, 0
      %v434 = vsel %vm426, %v391, 0
      %v437 = vsel %vm426, %v392, 0
      %vm439 = vcmask 1045504
      %v441 = vsel %vm439, %v385, 0
      %443 = vmatprep.subr.mxu0 0.0
      %444 = vmatpush1.msra.mxu0 0.0
      %445 = vmatprep.subr.mxu0 0.0
      %446 = vmatpush1.msra.mxu0 0.0
      %447 = vmatprep.subr.mxu0 0.0
      %448 = vmatpush1.msra.mxu0 0.0
      %449 = vmatprep.subr.mxu0 0.0
      %450 = vmatpush1.msra.mxu0 0.0
      %451 = vmatprep.subr.mxu0 0.0
      %452 = vmatpush1.msra.mxu0 0.0
      %453 = vmatprep.subr.mxu0 0.0
      %454 = vmatpush1.msra.mxu0 0.0
      %455 = vmatprep.subr.mxu0 0.0
      %456 = vmatpush1.msra.mxu0 0.0
      %457 = vmatprep.subr.mxu0 0.0
      %458 = vmatpush1.msra.mxu0 0.0
      %459 = vmatprep.subr.mxu0 0.0
      %460 = vmatpush1.msra.mxu0 0.0
      %461 = vmatprep.subr.mxu0 0.0
      %462 = vmatpush1.msra.mxu0 0.0
      %463 = vmatprep.subr.mxu0 0.0
      %464 = vmatpush1.msra.mxu0 0.0
      %465 = vmatprep.subr.mxu0 0.0
      %466 = vmatpush1.msra.mxu0 0.0
      %467 = vmatprep.subr.mxu0 0.0
      %468 = vmatpush1.msra.mxu0 %v441
      %469 = vmatprep.subr.mxu0 0.0
      %470 = vmatpush1.msra.mxu0 %v384
      %471 = vmatprep.subr.mxu0 0.0
      %472 = vmatpush1.msra.mxu0 %v383
      %473 = vmatprep.subr.mxu0 0.0
      %474 = vmatpush1.msra.mxu0 %v382
      %475 = vmatprep.subr.mxu0 0.0
      %476 = vmatpush2.msra.mxu0 0.0
      %477 = vmatprep.subr.mxu0 0.0
      %478 = vmatpush2.msra.mxu0 0.0
      %479 = vmatprep.subr.mxu0 0.0
      %480 = vmatpush2.msra.mxu0 0.0
      %481 = vmatprep.subr.mxu0 0.0
      %482 = vmatpush2.msra.mxu0 0.0
      %483 = vmatprep.subr.mxu0 0.0
      %484 = vmatpush2.msra.mxu0 0.0
      %485 = vmatprep.subr.mxu0 0.0
      %486 = vmatpush2.msra.mxu0 0.0
      %487 = vmatprep.subr.mxu0 0.0
      %488 = vmatpush2.msra.mxu0 0.0
      %489 = vmatprep.subr.mxu0 0.0
      %490 = vmatpush2.msra.mxu0 0.0
      %491 = vmatprep.subr.mxu0 0.0
      %492 = vmatpush2.msra.mxu0 0.0
      %493 = vmatprep.subr.mxu0 0.0
      %494 = vmatpush2.msra.mxu0 0.0
      %495 = vmatprep.subr.mxu0 0.0
      %496 = vmatpush2.msra.mxu0 0.0
      %497 = vmatprep.subr.mxu0 0.0
      %498 = vmatpush2.msra.mxu0 0.0
      %499 = vmatprep.subr.mxu0 0.0
      %500 = vmatpush2.msra.mxu0 0.0
      %501 = vmatprep.subr.mxu0 0.0
      %502 = vmatpush2.msra.mxu0 0.0
      %503 = vmatprep.subr.mxu0 0.0
      %504 = vmatpush2.msra.mxu0 0.0
      %505 = vmatprep.subr.mxu0 0.0
      %506 = vmatpush2.msra.mxu0 0.0
      %507 = vmatprep.mubr.f32.mxu0 0.0
      %508 = vmatmul.mubr.f32.gmra.mxu0 %v428
      %v509 = vpop.f32.mrf.mxu0
      %v510 = vadd.f32 %v422, %v509
      %v511 = vpop.f32.mrf.mxu0
      %512 = vmatprep.mubr.f32.mxu0 0.0
      %513 = vmatmul.mubr.f32.gmra.mxu0 %v431
      %v514 = vpop.f32.mrf.mxu0
      %v515 = vadd.f32 %v423, %v514
      %v516 = vpop.f32.mrf.mxu0
      %517 = vmatprep.mubr.f32.mxu0 0.0
      %518 = vmatmul.mubr.f32.gmra.mxu0 %v434
      %v519 = vpop.f32.mrf.mxu0
      %v520 = vadd.f32 %v424, %v519
      %v521 = vpop.f32.mrf.mxu0
      %522 = vmatprep.mubr.f32.mxu0 0.0
      %523 = vmatmul.mubr.f32.gmra.mxu0 %v437
      %v524 = vpop.f32.mrf.mxu0
      %v525 = vadd.f32 %v425, %v524
      %v526 = vpop.f32.mrf.mxu0
      %527 = vdwg.mxu0
      %528 = vset.pattern.permute.xlu0 1
      %529 = vperm.xlu0 %528, %v394
      %v530 = vpop.permute.xlu0 %529
      %532 = vset.pattern.permute.xlu0 1
      %533 = vperm.xlu0 %532, %v395
      %v534 = vpop.permute.xlu0 %533
      %536 = vset.pattern.permute.xlu0 1
      %537 = vperm.xlu0 %536, %v396
      %v538 = vpop.permute.xlu0 %537
      %540 = vset.pattern.permute.xlu0 1
      %541 = vperm.xlu0 %540, %v397
      %v542 = vpop.permute.xlu0 %541
      %v544 = vlaneseq
      %v545 = vshrl.u32 %v544, 7
      %v546 = vsub.s32 1, %v545
      %v547 = vrot.slane %v386, %v546
      %v548 = vmul.f32 %v530, %v547
      %v549 = vmul.f32 %v534, %v547
      %v550 = vmul.f32 %v538, %v547
      %v551 = vmul.f32 %v542, %v547
      %v552 = vadd.f32 %v510, %v548
      %v553 = vadd.f32 %v515, %v549
      %v554 = vadd.f32 %v520, %v550
      %v555 = vadd.f32 %v525, %v551
      %s556 = scalar_lea.vmem %s4, %s387
      %v557 = vld [vmem:[%s556] sm:$0xff]
      %v558 = vld [vmem:[%s556 + $0x8] sm:$0xff]
      %v559 = vld [vmem:[%s556 + $0x10] sm:$0xff]
      %v560 = vld [vmem:[%s556 + $0x18] sm:$0xff]
      %562 = vset.pattern.permute.xlu0 0
      %563 = vperm.xlu0 %562, %v557
      %v564 = vpop.permute.xlu0 %563
      %567 = vset.pattern.permute.xlu0 0
      %568 = vperm.xlu0 %567, %v558
      %v569 = vpop.permute.xlu0 %568
      %572 = vset.pattern.permute.xlu0 0
      %573 = vperm.xlu0 %572, %v559
      %v574 = vpop.permute.xlu0 %573
      %577 = vset.pattern.permute.xlu0 0
      %578 = vperm.xlu0 %577, %v560
      %v579 = vpop.permute.xlu0 %578
      %v581 = vadd.f32 %v552, %v564
      %v582 = vadd.f32 %v553, %v569
      %v583 = vadd.f32 %v554, %v574
      %v584 = vadd.f32 %v555, %v579
      %v585 = vmax.f32 %v581, 0.0
      %v586 = vmax.f32 %v582, 0.0
      %v587 = vmax.f32 %v583, 0.0
      %v588 = vmax.f32 %v584, 0.0
      %s589 = smul.u32 %s22, 16
      %s590 = scalar_lea.vmem %s5, %s589
      %v591 = vld [vmem:[%s590] sm:$0xff]
      %v592 = vld [vmem:[%s590 + $0x8] sm:$0xff]
      %s593 = scalar_lea.vmem %s6, %s589
      %v594 = vld [vmem:[%s593] sm:$0xff]
      %v595 = vld [vmem:[%s593 + $0x8] sm:$0xff]
      %597 = vset.pattern.permute.xlu0 0
      %598 = vperm.xlu0 %597, %v594
      %v599 = vpop.permute.xlu0 %598
      %602 = vset.pattern.permute.xlu0 0
      %603 = vperm.xlu0 %602, %v595
      %v604 = vpop.permute.xlu0 %603
      %vm606 = vcmask 261120
      %v608 = vsel %vm606, %v591, 0
      %v611 = vsel %vm606, %v592, 0
      %613 = vmatprep.subr.mxu0 0.0
      %614 = vmatpush1.msra.mxu0 0.0
      %615 = vmatprep.subr.mxu0 0.0
      %616 = vmatpush1.msra.mxu0 0.0
      %617 = vmatprep.subr.mxu0 0.0
      %618 = vmatpush1.msra.mxu0 0.0
      %619 = vmatprep.subr.mxu0 0.0
      %620 = vmatpush1.msra.mxu0 0.0
      %621 = vmatprep.subr.mxu0 0.0
      %622 = vmatpush1.msra.mxu0 0.0
      %623 = vmatprep.subr.mxu0 0.0
      %624 = vmatpush1.msra.mxu0 0.0
      %625 = vmatprep.subr.mxu0 0.0
      %626 = vmatpush1.msra.mxu0 0.0
      %627 = vmatprep.subr.mxu0 0.0
      %628 = vmatpush1.msra.mxu0 0.0
      %629 = vmatprep.subr.mxu0 0.0
      %630 = vmatpush1.msra.mxu0 0.0
      %631 = vmatprep.subr.mxu0 0.0
      %632 = vmatpush1.msra.mxu0 0.0
      %633 = vmatprep.subr.mxu0 0.0
      %634 = vmatpush1.msra.mxu0 0.0
      %635 = vmatprep.subr.mxu0 0.0
      %636 = vmatpush1.msra.mxu0 0.0
      %637 = vmatprep.subr.mxu0 0.0
      %638 = vmatpush1.msra.mxu0 %v588
      %639 = vmatprep.subr.mxu0 0.0
      %640 = vmatpush1.msra.mxu0 %v587
      %641 = vmatprep.subr.mxu0 0.0
      %642 = vmatpush1.msra.mxu0 %v586
      %643 = vmatprep.subr.mxu0 0.0
      %644 = vmatpush1.msra.mxu0 %v585
      %645 = vmatprep.subr.mxu0 0.0
      %646 = vmatpush2.msra.mxu0 0.0
      %647 = vmatprep.subr.mxu0 0.0
      %648 = vmatpush2.msra.mxu0 0.0
      %649 = vmatprep.subr.mxu0 0.0
      %650 = vmatpush2.msra.mxu0 0.0
      %651 = vmatprep.subr.mxu0 0.0
      %652 = vmatpush2.msra.mxu0 0.0
      %653 = vmatprep.subr.mxu0 0.0
      %654 = vmatpush2.msra.mxu0 0.0
      %655 = vmatprep.subr.mxu0 0.0
      %656 = vmatpush2.msra.mxu0 0.0
      %657 = vmatprep.subr.mxu0 0.0
      %658 = vmatpush2.msra.mxu0 0.0
      %659 = vmatprep.subr.mxu0 0.0
      %660 = vmatpush2.msra.mxu0 0.0
      %661 = vmatprep.subr.mxu0 0.0
      %662 = vmatpush2.msra.mxu0 0.0
      %663 = vmatprep.subr.mxu0 0.0
      %664 = vmatpush2.msra.mxu0 0.0
      %665 = vmatprep.subr.mxu0 0.0
      %666 = vmatpush2.msra.mxu0 0.0
      %667 = vmatprep.subr.mxu0 0.0
      %668 = vmatpush2.msra.mxu0 0.0
      %669 = vmatprep.subr.mxu0 0.0
      %670 = vmatpush2.msra.mxu0 0.0
      %671 = vmatprep.subr.mxu0 0.0
      %672 = vmatpush2.msra.mxu0 0.0
      %673 = vmatprep.subr.mxu0 0.0
      %674 = vmatpush2.msra.mxu0 0.0
      %675 = vmatprep.subr.mxu0 0.0
      %676 = vmatpush2.msra.mxu0 0.0
      %677 = vmatprep.mubr.f32.mxu0 0.0
      %678 = vmatmul.mubr.f32.gmra.mxu0 %v608
      %v679 = vpop.f32.mrf.mxu0
      %v680 = vadd.f32 %v599, %v679
      %v681 = vpop.f32.mrf.mxu0
      %682 = vmatprep.mubr.f32.mxu0 0.0
      %683 = vmatmul.mubr.f32.gmra.mxu0 %v611
      %v684 = vpop.f32.mrf.mxu0
      %v685 = vadd.f32 %v604, %v684
      %v686 = vpop.f32.mrf.mxu0
      %687 = vdwg.mxu0
      %v688 = vmax.f32 %v680, 0.0
      %v689 = vmax.f32 %v685, 0.0
      %s690 = smul.u32 %s22, 8
      %s691 = scalar_lea.vmem %s7, %s690
      %v692 = vld [vmem:[%s691] sm:$0xff]
      %s693 = scalar_lea.vmem %s8, %s690
      %v694 = vld [vmem:[%s693] sm:$0xff]
      %696 = vset.pattern.permute.xlu0 0
      %697 = vperm.xlu0 %696, %v694
      %v698 = vpop.permute.xlu0 %697
      %vm700 = vcmask 130048
      %v702 = vsel %vm700, %v692, 0
      %704 = vmatprep.subr.mxu0 0.0
      %705 = vmatpush1.msra.mxu0 0.0
      %706 = vmatprep.subr.mxu0 0.0
      %707 = vmatpush1.msra.mxu0 0.0
      %708 = vmatprep.subr.mxu0 0.0
      %709 = vmatpush1.msra.mxu0 0.0
      %710 = vmatprep.subr.mxu0 0.0
      %711 = vmatpush1.msra.mxu0 0.0
      %712 = vmatprep.subr.mxu0 0.0
      %713 = vmatpush1.msra.mxu0 0.0
      %714 = vmatprep.subr.mxu0 0.0
      %715 = vmatpush1.msra.mxu0 0.0
      %716 = vmatprep.subr.mxu0 0.0
      %717 = vmatpush1.msra.mxu0 0.0
      %718 = vmatprep.subr.mxu0 0.0
      %719 = vmatpush1.msra.mxu0 0.0
      %720 = vmatprep.subr.mxu0 0.0
      %721 = vmatpush1.msra.mxu0 0.0
      %722 = vmatprep.subr.mxu0 0.0
      %723 = vmatpush1.msra.mxu0 0.0
      %724 = vmatprep.subr.mxu0 0.0
      %725 = vmatpush1.msra.mxu0 0.0
      %726 = vmatprep.subr.mxu0 0.0
      %727 = vmatpush1.msra.mxu0 0.0
      %728 = vmatprep.subr.mxu0 0.0
      %729 = vmatpush1.msra.mxu0 0.0
      %730 = vmatprep.subr.mxu0 0.0
      %731 = vmatpush1.msra.mxu0 0.0
      %732 = vmatprep.subr.mxu0 0.0
      %733 = vmatpush1.msra.mxu0 %v689
      %734 = vmatprep.subr.mxu0 0.0
      %735 = vmatpush1.msra.mxu0 %v688
      %736 = vmatprep.subr.mxu0 0.0
      %737 = vmatpush2.msra.mxu0 0.0
      %738 = vmatprep.subr.mxu0 0.0
      %739 = vmatpush2.msra.mxu0 0.0
      %740 = vmatprep.subr.mxu0 0.0
      %741 = vmatpush2.msra.mxu0 0.0
      %742 = vmatprep.subr.mxu0 0.0
      %743 = vmatpush2.msra.mxu0 0.0
      %744 = vmatprep.subr.mxu0 0.0
      %745 = vmatpush2.msra.mxu0 0.0
      %746 = vmatprep.subr.mxu0 0.0
      %747 = vmatpush2.msra.mxu0 0.0
      %748 = vmatprep.subr.mxu0 0.0
      %749 = vmatpush2.msra.mxu0 0.0
      %750 = vmatprep.subr.mxu0 0.0
      %751 = vmatpush2.msra.mxu0 0.0
      %752 = vmatprep.subr.mxu0 0.0
      %753 = vmatpush2.msra.mxu0 0.0
      %754 = vmatprep.subr.mxu0 0.0
      %755 = vmatpush2.msra.mxu0 0.0
      %756 = vmatprep.subr.mxu0 0.0
      %757 = vmatpush2.msra.mxu0 0.0
      %758 = vmatprep.subr.mxu0 0.0
      %759 = vmatpush2.msra.mxu0 0.0
      %760 = vmatprep.subr.mxu0 0.0
      %761 = vmatpush2.msra.mxu0 0.0
      %762 = vmatprep.subr.mxu0 0.0
      %763 = vmatpush2.msra.mxu0 0.0
      %764 = vmatprep.subr.mxu0 0.0
      %765 = vmatpush2.msra.mxu0 0.0
      %766 = vmatprep.subr.mxu0 0.0
      %767 = vmatpush2.msra.mxu0 0.0
      %768 = vmatprep.mubr.f32.mxu0 0.0
      %769 = vmatmul.mubr.f32.gmra.mxu0 %v702
      %v770 = vpop.f32.mrf.mxu0
      %v771 = vadd.f32 %v698, %v770
      %v772 = vpop.f32.mrf.mxu0
      %773 = vdwg.mxu0
      %v774 = vmax.f32 %v771, 0.0
      %s775 = smul.u32 %s22, 4
      %s776 = scalar_lea.vmem %s9, %s775
      %v777 = vld [vmem:[%s776] sm:$0x7]
      %s778 = scalar_lea.vmem %s10, %s775
      %v779 = vld [vmem:[%s778] sm:$0x7]
      %781 = vset.pattern.permute.xlu0 0
      %782 = vperm.xlu0 %781, %v779
      %v783 = vpop.permute.xlu0 %782
      %vm785 = vcmask 64512
      %v787 = vsel %vm785, %v777, 0
      %789 = vmatprep.subr.mxu0 0.0
      %790 = vmatpush1.msra.mxu0 0.0
      %791 = vmatprep.subr.mxu0 0.0
      %792 = vmatpush1.msra.mxu0 0.0
      %793 = vmatprep.subr.mxu0 0.0
      %794 = vmatpush1.msra.mxu0 0.0
      %795 = vmatprep.subr.mxu0 0.0
      %796 = vmatpush1.msra.mxu0 0.0
      %797 = vmatprep.subr.mxu0 0.0
      %798 = vmatpush1.msra.mxu0 0.0
      %799 = vmatprep.subr.mxu0 0.0
      %800 = vmatpush1.msra.mxu0 0.0
      %801 = vmatprep.subr.mxu0 0.0
      %802 = vmatpush1.msra.mxu0 0.0
      %803 = vmatprep.subr.mxu0 0.0
      %804 = vmatpush1.msra.mxu0 0.0
      %805 = vmatprep.subr.mxu0 0.0
      %806 = vmatpush1.msra.mxu0 0.0
      %807 = vmatprep.subr.mxu0 0.0
      %808 = vmatpush1.msra.mxu0 0.0
      %809 = vmatprep.subr.mxu0 0.0
      %810 = vmatpush1.msra.mxu0 0.0
      %811 = vmatprep.subr.mxu0 0.0
      %812 = vmatpush1.msra.mxu0 0.0
      %813 = vmatprep.subr.mxu0 0.0
      %814 = vmatpush1.msra.mxu0 0.0
      %815 = vmatprep.subr.mxu0 0.0
      %816 = vmatpush1.msra.mxu0 0.0
      %817 = vmatprep.subr.mxu0 0.0
      %818 = vmatpush1.msra.mxu0 0.0
      %819 = vmatprep.subr.mxu0 0.0
      %820 = vmatpush1.msra.mxu0 %v774
      %821 = vmatprep.subr.mxu0 0.0
      %822 = vmatpush2.msra.mxu0 0.0
      %823 = vmatprep.subr.mxu0 0.0
      %824 = vmatpush2.msra.mxu0 0.0
      %825 = vmatprep.subr.mxu0 0.0
      %826 = vmatpush2.msra.mxu0 0.0
      %827 = vmatprep.subr.mxu0 0.0
      %828 = vmatpush2.msra.mxu0 0.0
      %829 = vmatprep.subr.mxu0 0.0
      %830 = vmatpush2.msra.mxu0 0.0
      %831 = vmatprep.subr.mxu0 0.0
      %832 = vmatpush2.msra.mxu0 0.0
      %833 = vmatprep.subr.mxu0 0.0
      %834 = vmatpush2.msra.mxu0 0.0
      %835 = vmatprep.subr.mxu0 0.0
      %836 = vmatpush2.msra.mxu0 0.0
      %837 = vmatprep.subr.mxu0 0.0
      %838 = vmatpush2.msra.mxu0 0.0
      %839 = vmatprep.subr.mxu0 0.0
      %840 = vmatpush2.msra.mxu0 0.0
      %841 = vmatprep.subr.mxu0 0.0
      %842 = vmatpush2.msra.mxu0 0.0
      %843 = vmatprep.subr.mxu0 0.0
      %844 = vmatpush2.msra.mxu0 0.0
      %845 = vmatprep.subr.mxu0 0.0
      %846 = vmatpush2.msra.mxu0 0.0
      %847 = vmatprep.subr.mxu0 0.0
      %848 = vmatpush2.msra.mxu0 0.0
      %849 = vmatprep.subr.mxu0 0.0
      %850 = vmatpush2.msra.mxu0 0.0
      %851 = vmatprep.subr.mxu0 0.0
      %852 = vmatpush2.msra.mxu0 0.0
      %853 = vmatprep.mubr.f32.mxu0 0.0
      %854 = vmatmul.mubr.f32.gmra.mxu0 %v787
      %v855 = vpop.f32.mrf.mxu0
      %v856 = vadd.f32 %v783, %v855
      %v857 = vpop.f32.mrf.mxu0
      %858 = vdwg.mxu0
      %v859 = vtanh.pop %v856
      %vm860 = vcmask 256000
      %861 = vst.msk [vmem:[%s381] sm:$0x7] %vm860, %v859
      %p862 = scmp.lt.s32.totalorder %s22, 3
      %s863 = scalar_select %p862, %s22, 3
      %s864 = smul.addr %s863, 4
      %s865 = scalar_lea.vmem %s11, %s864
      // Predicated region
      $region65: #{tpu_custom_call.1} parent=63 // pred_check
        %p866 = pneg %p276
      $region66: #{tpu_custom_call.1} parent=63 // pred_check_branch
        %868 = sbr.rel (%p866) target = $region68
      $region67: #{tpu_custom_call.1} parent=63 // pred_region
        _
      $region68: #{tpu_custom_call.1} parent=63 // pred_fallthru
        _
    $region64: #{tpu_custom_call.1} parent=5 // pred_fallthru
      _
    %p869 = scmp.le.s32.totalorder 2, %s17
    // Predicated region
    $region69: #{tpu_custom_call.1} parent=5 // pred_check
      %p870 = pneg %p869
    $region70: #{tpu_custom_call.1} parent=5 // pred_check_branch
      %872 = sbr.rel (%p870) target = $region72
    $region71: #{tpu_custom_call.1} parent=5 // pred_region
      %s873 = ssub.s32 %s17, 2
      // Predicated region
      $region73: #{tpu_custom_call.1} parent=71 // pred_check
        %p874 = pneg %p282
      $region74: #{tpu_custom_call.1} parent=71 // pred_check_branch
        %876 = sbr.rel (%p874) target = $region76
      $region75: #{tpu_custom_call.1} parent=71 // pred_region
        %p877 = scmp.lt.s32.totalorder %s23, 3
        %s878 = scalar_select %p877, %s23, 3
        %s879 = smul.addr %s878, 4
        %s880 = scalar_lea.vmem %s11, %s879
      $region76: #{tpu_custom_call.1} parent=71 // pred_fallthru
        _
    $region72: #{tpu_custom_call.1} parent=5 // pred_fallthru
      _
  $region6: #{tpu_custom_call.1} parent=0 // loop_footer
    %s21 = sadd.s32 1, %s17
  $region7: #{tpu_custom_call.1} parent=0 // loop_footer_branch
    %16 = sbr.rel target = $region3
  $region8: #{tpu_custom_call.1} parent=0 // loop_exit
    _

</llo_original>
